<compile_context>
chip_gen: v7x
topology: tpu7x:2x2x1
jax: 0.10.0
libtpu: 0.0.40
codegen_flags: <defaults>
</compile_context>

<pallas_src>
import functools

import jax
import jax.numpy as jnp
from jax.experimental import pallas as pl
from jax.experimental.pallas import tpu as pltpu


def _round_up(x, m):
    return ((x + m - 1) // m) * m


def _film_kernel(pitch_ref, timbre_ref, w_cat_ref, b_cat_ref, out_ref, *, pitch_dim):
    # One fused (bm, T) @ (T, 2P) matmul on the MXU, f32 accumulate.
    res = jnp.dot(timbre_ref[...], w_cat_ref[...],
                  preferred_element_type=jnp.float32) + b_cat_ref[...]

    # Static lane slices: first P lanes = scale, last P lanes = shift.
    scale = res[:, :pitch_dim]
    shift = res[:, pitch_dim:]

    # FiLM modulation on the VPU, kept in f32 (v5e has no bf16 VALU).
    pitch = pitch_ref[...].astype(jnp.float32)
    out_ref[...] = (scale * pitch + shift).astype(out_ref.dtype)


def film_forward(pitch_latent, timbre_latent, w_scale, b_scale, w_shift, b_shift,
                 *, block_rows=512, use_bf16_matmul=False):
    """FiLM forward.

    pitch_latent:    (B, pitch_dim)
    timbre_latent:   (B, timbre_dim)
    w_scale/w_shift: (timbre_dim, pitch_dim)   (already transposed vs. nn.Linear)
    b_scale/b_shift: (pitch_dim,)
    use_bf16_matmul: cast MXU operands to bf16 (recommended on v6e/v7x once the
                     batch is large enough to be MXU-visible); accumulation and
                     the FiLM epilogue stay in f32.
    """
    B, P = pitch_latent.shape
    _, T = timbre_latent.shape
    out_dtype = pitch_latent.dtype

    # Fuse the two Linear layers: single lane-dense (T, 2P) weight / (1, 2P) bias.
    w_cat = jnp.concatenate([w_scale, w_shift], axis=1)                 # (T, 2P)
    b_cat = jnp.concatenate([b_scale, b_shift]).reshape(1, 2 * P)       # (1, 2P)

    timbre_in = timbre_latent
    if use_bf16_matmul:
        w_cat = w_cat.astype(jnp.bfloat16)
        timbre_in = timbre_in.astype(jnp.bfloat16)

    # Row-tile the batch; sublane tile must be a multiple of 8.
    bm = min(_round_up(block_rows, 8), _round_up(B, 8))
    Bp = _round_up(B, bm)
    if Bp != B:
        pad = Bp - B
        pitch_latent = jnp.pad(pitch_latent, ((0, pad), (0, 0)))
        timbre_in = jnp.pad(timbre_in, ((0, pad), (0, 0)))

    grid = (Bp // bm,)

    out = pl.pallas_call(
        functools.partial(_film_kernel, pitch_dim=P),
        out_shape=jax.ShapeDtypeStruct((Bp, P), out_dtype),
        grid=grid,
        in_specs=[
            pl.BlockSpec((bm, P), lambda i: (i, 0)),       # pitch_latent  (tiled)
            pl.BlockSpec((bm, T), lambda i: (i, 0)),       # timbre_latent (tiled)
            pl.BlockSpec((T, 2 * P), lambda i: (0, 0)),    # fused weight  (resident)
            pl.BlockSpec((1, 2 * P), lambda i: (0, 0)),    # fused bias    (resident)
        ],
        out_specs=pl.BlockSpec((bm, P), lambda i: (i, 0)),
        compiler_params=pltpu.CompilerParams(
            dimension_semantics=("parallel",)),
    )(pitch_latent, timbre_in, w_cat, b_cat)

    return out[:B]


def _film_ref(pitch, timbre, w_scale, b_scale, w_shift, b_shift):
    return (timbre @ w_scale + b_scale) * pitch + (timbre @ w_shift + b_shift)


if __name__ == "__main__":
    # Small shapes consistent with the module: batch=8, pitch_dim=64, timbre_dim=32.
    B, pitch_dim, timbre_dim = 8, 64, 32

    key = jax.random.PRNGKey(0)
    k_pitch, k_timbre, k_ws, k_bs, k_wt, k_bt, k_pb, k_tb = jax.random.split(key, 8)

    pitch_latent = jax.random.normal(k_pitch, (B, pitch_dim), dtype=jnp.float32)
    timbre_latent = jax.random.normal(k_timbre, (B, timbre_dim), dtype=jnp.float32)

    # Deterministic "Linear" params, stored pre-transposed as (in, out).
    w_scale = jax.random.normal(k_ws, (timbre_dim, pitch_dim), dtype=jnp.float32) * 0.1
    b_scale = jax.random.normal(k_bs, (pitch_dim,), dtype=jnp.float32) * 0.1
    w_shift = jax.random.normal(k_wt, (timbre_dim, pitch_dim), dtype=jnp.float32) * 0.1
    b_shift = jax.random.normal(k_bt, (pitch_dim,), dtype=jnp.float32) * 0.1

    # --- Small, f32-exact check ---------------------------------------------
    out = film_forward(pitch_latent, timbre_latent,
                       w_scale, b_scale, w_shift, b_shift)
    out = jax.block_until_ready(out)
    ref = _film_ref(pitch_latent, timbre_latent, w_scale, b_scale, w_shift, b_shift)
    assert out.shape == (B, pitch_dim)
    assert jnp.allclose(out, ref, atol=1e-5, rtol=1e-5)

    # --- Larger batch: exercises the row-tiled grid (multiple steps) --------
    Bl = 1024
    pitch_l = jax.random.normal(k_pb, (Bl, pitch_dim), dtype=jnp.float32)
    timbre_l = jax.random.normal(k_tb, (Bl, timbre_dim), dtype=jnp.float32)

    out_l = film_forward(pitch_l, timbre_l, w_scale, b_scale, w_shift, b_shift,
                         block_rows=512)
    out_l = jax.block_until_ready(out_l)
    ref_l = _film_ref(pitch_l, timbre_l, w_scale, b_scale, w_shift, b_shift)
    assert out_l.shape == (Bl, pitch_dim)
    assert jnp.allclose(out_l, ref_l, atol=1e-5, rtol=1e-5)

    # --- bf16 MXU-operand path (v6e/v7x recommendation), relaxed tolerance ---
    out_bf = film_forward(pitch_l, timbre_l, w_scale, b_scale, w_shift, b_shift,
                          block_rows=512, use_bf16_matmul=True)
    out_bf = jax.block_until_ready(out_bf)
    assert out_bf.shape == (Bl, pitch_dim)
    assert jnp.allclose(out_bf, ref_l, atol=5e-2, rtol=5e-2)

    print("KERNEL_OK")
</pallas_src>

<mosaic_0001>
module attributes {stable_mosaic.version = 11 : i64} {
  func.func @_film_kernel(%arg0: i32, %arg1: memref<8x64xf32, #tpu.memory_space<vmem>>, %arg2: memref<8x32xf32, #tpu.memory_space<vmem>>, %arg3: memref<32x128xf32, #tpu.memory_space<vmem>>, %arg4: memref<1x128xf32, #tpu.memory_space<vmem>>, %arg5: memref<8x64xf32, #tpu.memory_space<vmem>>) attributes {dimension_semantics = [#tpu.dimension_semantics<parallel>], iteration_bounds = array<i64: 1>, scalar_prefetch = 0 : i64, scratch_operands = 0 : i64, tpu.core_type = #tpu.core_type<tc>, window_params = [{transform_indices = @transform_0, window_bounds = array<i64: 8, 64>}, {transform_indices = @transform_1, window_bounds = array<i64: 8, 32>}, {pipeline_mode = #tpu.pipeline_mode<synchronous>, transform_indices = @transform_2, window_bounds = array<i64: 32, 128>}, {pipeline_mode = #tpu.pipeline_mode<synchronous>, transform_indices = @transform_3, window_bounds = array<i64: 1, 128>}, {transform_indices = @transform_4, window_bounds = array<i64: 8, 64>}]} {
    %c0 = arith.constant 0 : index
    %c0_0 = arith.constant 0 : index
    %0 = vector.load %arg2[%c0, %c0_0] : memref<8x32xf32, #tpu.memory_space<vmem>>, vector<8x32xf32>
    %c0_1 = arith.constant 0 : index
    %c0_2 = arith.constant 0 : index
    %1 = vector.load %arg3[%c0_1, %c0_2] : memref<32x128xf32, #tpu.memory_space<vmem>>, vector<32x128xf32>
    %cst = arith.constant dense<0.000000e+00> : vector<8x128xf32>
    %2 = tpu.matmul %0, %1, %cst {dimension_numbers = #tpu.dot_dimension_numbers<[1], [0], [0], [1], [0, 0, 1, 1], [], []>} : vector<8x32xf32>, vector<32x128xf32>, vector<8x128xf32> -> vector<8x128xf32>
    %c0_3 = arith.constant 0 : index
    %c0_4 = arith.constant 0 : index
    %3 = vector.load %arg4[%c0_3, %c0_4] : memref<1x128xf32, #tpu.memory_space<vmem>>, vector<1x128xf32>
    %4 = vector.broadcast %3 : vector<1x128xf32> to vector<8x128xf32>
    %5 = arith.addf %2, %4 : vector<8x128xf32>
    %6 = vector.extract_strided_slice %5 {offsets = [0, 0], sizes = [8, 64], strides = [1, 1]} : vector<8x128xf32> to vector<8x64xf32>
    %7 = vector.extract_strided_slice %5 {offsets = [0, 64], sizes = [8, 64], strides = [1, 1]} : vector<8x128xf32> to vector<8x64xf32>
    %c0_5 = arith.constant 0 : index
    %c0_6 = arith.constant 0 : index
    %8 = vector.load %arg1[%c0_5, %c0_6] : memref<8x64xf32, #tpu.memory_space<vmem>>, vector<8x64xf32>
    %9 = arith.mulf %6, %8 : vector<8x64xf32>
    %10 = arith.addf %9, %7 : vector<8x64xf32>
    %c0_7 = arith.constant 0 : index
    %c0_8 = arith.constant 0 : index
    %11 = vector.load %arg5[%c0_7, %c0_8] : memref<8x64xf32, #tpu.memory_space<vmem>>, vector<8x64xf32>
    tpu.vector_store %arg5[%c0_7, %c0_8], %10 {strides = array<i32>} : memref<8x64xf32, #tpu.memory_space<vmem>>, vector<8x64xf32>,
    return
  }
  func.func @transform_0(%arg0: i32) -> (i32, i32) {
    %c0_i32 = arith.constant 0 : i32
    %c0_i32_0 = arith.constant 0 : i32
    return %arg0, %c0_i32 : i32, i32
  }
  func.func @transform_1(%arg0: i32) -> (i32, i32) {
    %c0_i32 = arith.constant 0 : i32
    %c0_i32_0 = arith.constant 0 : i32
    return %arg0, %c0_i32 : i32, i32
  }
  func.func @transform_2(%arg0: i32) -> (i32, i32) {
    %c0_i32 = arith.constant 0 : i32
    %c0_i32_0 = arith.constant 0 : i32
    %c0_i32_1 = arith.constant 0 : i32
    return %c0_i32, %c0_i32_0 : i32, i32
  }
  func.func @transform_3(%arg0: i32) -> (i32, i32) {
    %c0_i32 = arith.constant 0 : i32
    %c0_i32_0 = arith.constant 0 : i32
    %c0_i32_1 = arith.constant 0 : i32
    return %c0_i32, %c0_i32_0 : i32, i32
  }
  func.func @transform_4(%arg0: i32) -> (i32, i32) {
    %c0_i32 = arith.constant 0 : i32
    %c0_i32_0 = arith.constant 0 : i32
    return %arg0, %c0_i32 : i32, i32
  }
}

</mosaic_0001>

<llo_original>
// kernel: tpu_custom_call.1
$region0: #{tpu_custom_call.1}
  #allocation0 [shape = 'u32[]', space=smem, size = 0x4, offset = 0x4, fixed_abs, tag = 'smem constant byte address 0x4 - core index']
  #allocation1 [shape = 'u32[144,128]{1,0:T(1,128)}', space=vmem, size = 0x12000, scoped, tag = 'internal scratch']
  %s0 = inlined_call_operand.hbm [shape: f32[8,64], index: 0, kind: input, shape index: {}]
  %s1 = inlined_call_operand.hbm [shape: f32[8,32], index: 1, kind: input, shape index: {}]
  %s2 = inlined_call_operand.hbm [shape: f32[32,128], index: 2, kind: input, shape index: {}]
  %s3 = inlined_call_operand.vmem [shape: f32[1,128], index: 3, kind: input, shape index: {}]
  %s4 = inlined_call_operand.hbm [shape: f32[8,64], index: 4, kind: output, shape index: {}]
  %s5 = sld [smem:[#allocation0]]
  $region38: #{tpu_custom_call.1} parent=0
    _
  %s7 = ssub.s32 1, %s5
  %s8 = scalar_select 0, %s7, %s5
  $region1: #{tpu_custom_call.1} parent=0
    #allocation2 [shape = 'u8[4096]{0}', space=vmem, size = 0x1000, scoped, tag = 'input window, operand 0, single buffered']
    #allocation3 [shape = 's32[1]{0}', space=sflag, size = 0x4, scoped, tag = 'scoped memory for tpu_custom_call.1']
    #allocation4 [shape = 's32[1]{0}', space=sflag, size = 0x4, scoped, tag = 'scoped memory for tpu_custom_call.1']
    #allocation5 [shape = 'u8[4096]{0}', space=vmem, size = 0x1000, scoped, tag = 'input window, operand 1, single buffered']
    #allocation6 [shape = 's32[1]{0}', space=sflag, size = 0x4, scoped, tag = 'scoped memory for tpu_custom_call.1']
    #allocation7 [shape = 'u8[16384]{0}', space=vmem, size = 0x4000, scoped, tag = 'input window, operand 2, single buffered']
    #allocation8 [shape = 'u8[4096]{0}', space=vmem, size = 0x1000, scoped, tag = 'output window, operand 0, single buffered']
    %9 = vsyncpa [#allocation3], 0
    %10 = vsyncpa [#allocation6], 0
    %11 = vsyncpa [#allocation4], 0
    // Predicated region
    $region2: #{tpu_custom_call.1} parent=1 // pred_check
      _
    $region3: #{tpu_custom_call.1} parent=1 // pred_check_branch
      %13 = sbr.rel (0) target = $region5
    $region4: #{tpu_custom_call.1} parent=1 // pred_region
      %s15 = ssub.s32 128, 128
      %16 = vsyncadd [#allocation3], %s15
      %s18 = sshll.u32 [#allocation2], 4
      %s19 = int_to_ptr.vmem [resolvable:$true] %s18
      %21 = dma.hbm_to_vmem [thread:$0]  %s0, 128, %s19, [#allocation3]
    $region5: #{tpu_custom_call.1} parent=1 // pred_fallthru
      _
    // Predicated region
    $region6: #{tpu_custom_call.1} parent=1 // pred_check
      _
    $region7: #{tpu_custom_call.1} parent=1 // pred_check_branch
      %23 = sbr.rel (0) target = $region9
    $region8: #{tpu_custom_call.1} parent=1 // pred_region
      %s25 = ssub.s32 128, 128
      %26 = vsyncadd [#allocation6], %s25
      %s28 = sshll.u32 [#allocation5], 4
      %s29 = int_to_ptr.vmem [resolvable:$true] %s28
      %31 = dma.hbm_to_vmem [thread:$0]  %s1, 128, %s29, [#allocation6]
    $region9: #{tpu_custom_call.1} parent=1 // pred_fallthru
      _
    // Predicated region
    $region10: #{tpu_custom_call.1} parent=1 // pred_check
      _
    $region11: #{tpu_custom_call.1} parent=1 // pred_check_branch
      %33 = sbr.rel (0) target = $region13
    $region12: #{tpu_custom_call.1} parent=1 // pred_region
      %s35 = ssub.s32 512, 512
      %36 = vsyncadd [#allocation6], %s35
      %s37 = sshll.u32 [#allocation7], 4
      %s38 = int_to_ptr.vmem [resolvable:$true] %s37
      %43 = dma.hbm_to_vmem [thread:$0]  %s2, 512, %s38, [#allocation6], 128, 128, 8
    $region13: #{tpu_custom_call.1} parent=1 // pred_fallthru
      _
    // Predicated region
    $region14: #{tpu_custom_call.1} parent=1 // pred_check
      _
    $region15: #{tpu_custom_call.1} parent=1 // pred_check_branch
      %45 = sbr.rel (0) target = $region17
    $region16: #{tpu_custom_call.1} parent=1 // pred_region
      _
    $region17: #{tpu_custom_call.1} parent=1 // pred_fallthru
      _
    // Predicated region
    $region18: #{tpu_custom_call.1} parent=1 // pred_check
      _
    $region19: #{tpu_custom_call.1} parent=1 // pred_check_branch
      %47 = sbr.rel (0) target = $region21
    $region20: #{tpu_custom_call.1} parent=1 // pred_region
      %48 = dma.done [#allocation3], 128
    $region21: #{tpu_custom_call.1} parent=1 // pred_fallthru
      _
    // Predicated region
    $region22: #{tpu_custom_call.1} parent=1 // pred_check
      _
    $region23: #{tpu_custom_call.1} parent=1 // pred_check_branch
      %50 = sbr.rel (0) target = $region25
    $region24: #{tpu_custom_call.1} parent=1 // pred_region
      %51 = dma.done [#allocation6], 128
    $region25: #{tpu_custom_call.1} parent=1 // pred_fallthru
      _
    // Predicated region
    $region26: #{tpu_custom_call.1} parent=1 // pred_check
      _
    $region27: #{tpu_custom_call.1} parent=1 // pred_check_branch
      %53 = sbr.rel (0) target = $region29
    $region28: #{tpu_custom_call.1} parent=1 // pred_region
      %54 = dma.done [#allocation6], 512
    $region29: #{tpu_custom_call.1} parent=1 // pred_fallthru
      _
    %v55 = vld [vmem:[#allocation5] sm:$0xff]
    %v56 = vld [vmem:[#allocation7] sm:$0xff]
    %v57 = vld [vmem:[#allocation7 + $0x8] sm:$0xff]
    %v58 = vld [vmem:[#allocation7 + $0x10] sm:$0xff]
    %v59 = vld [vmem:[#allocation7 + $0x18] sm:$0xff]
    %v60 = vld [vmem:[%s3] sm:$0x1]
    %v62 = vlaneseq
    %v63 = vshrl.u32 %v62, 7
    %v64 = vsub.s32 0, %v63
    %v65 = vrot.slane %v60, %v64
    %vm67 = vcmask 261120
    %v69 = vsel %vm67, %v55, 0
    %71 = vmatprep.subr.mxu0 0.0
    %72 = vmatpush1.msra.mxu0 %v56
    %73 = vmatprep.subr.mxu0 0.0
    %74 = vmatpush1.msra.mxu0 %v57
    %75 = vmatprep.subr.mxu0 0.0
    %76 = vmatpush1.msra.mxu0 %v58
    %77 = vmatprep.subr.mxu0 0.0
    %78 = vmatpush1.msra.mxu0 %v59
    %79 = vmatprep.subr.mxu0 0.0
    %80 = vmatpush1.msra.mxu0 0.0
    %81 = vmatprep.subr.mxu0 0.0
    %82 = vmatpush1.msra.mxu0 0.0
    %83 = vmatprep.subr.mxu0 0.0
    %84 = vmatpush1.msra.mxu0 0.0
    %85 = vmatprep.subr.mxu0 0.0
    %86 = vmatpush1.msra.mxu0 0.0
    %87 = vmatprep.subr.mxu0 0.0
    %88 = vmatpush1.msra.mxu0 0.0
    %89 = vmatprep.subr.mxu0 0.0
    %90 = vmatpush1.msra.mxu0 0.0
    %91 = vmatprep.subr.mxu0 0.0
    %92 = vmatpush1.msra.mxu0 0.0
    %93 = vmatprep.subr.mxu0 0.0
    %94 = vmatpush1.msra.mxu0 0.0
    %95 = vmatprep.subr.mxu0 0.0
    %96 = vmatpush1.msra.mxu0 0.0
    %97 = vmatprep.subr.mxu0 0.0
    %98 = vmatpush1.msra.mxu0 0.0
    %99 = vmatprep.subr.mxu0 0.0
    %100 = vmatpush1.msra.mxu0 0.0
    %101 = vmatprep.subr.mxu0 0.0
    %102 = vmatpush1.msra.mxu0 0.0
    %103 = vmatprep.subr.mxu0 0.0
    %104 = vmatpush1.msra.mxu0 0.0
    %105 = vmatprep.subr.mxu0 0.0
    %106 = vmatpush1.msra.mxu0 0.0
    %107 = vmatprep.subr.mxu0 0.0
    %108 = vmatpush1.msra.mxu0 0.0
    %109 = vmatprep.subr.mxu0 0.0
    %110 = vmatpush1.msra.mxu0 0.0
    %111 = vmatprep.subr.mxu0 0.0
    %112 = vmatpush1.msra.mxu0 0.0
    %113 = vmatprep.subr.mxu0 0.0
    %114 = vmatpush1.msra.mxu0 0.0
    %115 = vmatprep.subr.mxu0 0.0
    %116 = vmatpush1.msra.mxu0 0.0
    %117 = vmatprep.subr.mxu0 0.0
    %118 = vmatpush1.msra.mxu0 0.0
    %119 = vmatprep.subr.mxu0 0.0
    %120 = vmatpush1.msra.mxu0 0.0
    %121 = vmatprep.subr.mxu0 0.0
    %122 = vmatpush1.msra.mxu0 0.0
    %123 = vmatprep.subr.mxu0 0.0
    %124 = vmatpush1.msra.mxu0 0.0
    %125 = vmatprep.subr.mxu0 0.0
    %126 = vmatpush1.msra.mxu0 0.0
    %127 = vmatprep.subr.mxu0 0.0
    %128 = vmatpush1.msra.mxu0 0.0
    %129 = vmatprep.subr.mxu0 0.0
    %130 = vmatpush1.msra.mxu0 0.0
    %131 = vmatprep.subr.mxu0 0.0
    %132 = vmatpush1.msra.mxu0 0.0
    %133 = vmatprep.subr.mxu0 0.0
    %134 = vmatpush1.msra.mxu0 0.0
    %135 = vmatprep.mubr.f32.mxu0 0.0
    %136 = vmatmul.mubr.f32.gmra.mrb[0].mxu0 %v69
    %v137 = vpop.f32.mrb[0].mxu0
    %v138 = vadd.f32 %v65, %v137
    %v139 = vpop.f32.mrb[0].mxu0
    %140 = vdwg.mxu0
    %v141 = vld [vmem:[#allocation2] sm:$0xff]
    %v142 = vmul.f32 %v138, %v141
    %144 = vrot.lane.b32.xlu0 %v138, 64
    %v145 = vpop.permute.xlu0 %144
    %v147 = vadd.f32 %v142, %v145
    %vm148 = vcmask 523264
    %149 = vst.msk [vmem:[#allocation8] sm:$0xff] %vm148, %v147
    // Predicated region
    $region30: #{tpu_custom_call.1} parent=1 // pred_check
      _
    $region31: #{tpu_custom_call.1} parent=1 // pred_check_branch
      %151 = sbr.rel (0) target = $region33
    $region32: #{tpu_custom_call.1} parent=1 // pred_region
      %s153 = ssub.s32 128, 128
      %154 = vsyncadd [#allocation4], %s153
      %s156 = sshll.u32 [#allocation8], 4
      %s157 = int_to_ptr.vmem [resolvable:$true] %s156
      %159 = dma.vmem_to_hbm [thread:$0]  %s157, 128, %s4, [#allocation4]
    $region33: #{tpu_custom_call.1} parent=1 // pred_fallthru
      _
    // Predicated region
    $region34: #{tpu_custom_call.1} parent=1 // pred_check
      _
    $region35: #{tpu_custom_call.1} parent=1 // pred_check_branch
      %161 = sbr.rel (0) target = $region37
    $region36: #{tpu_custom_call.1} parent=1 // pred_region
      %162 = dma.done [#allocation4], 128
    $region37: #{tpu_custom_call.1} parent=1 // pred_fallthru
      _
    %163 = vsyncpa [#allocation3], 1
    %164 = vsyncpa [#allocation6], 1
    %165 = vsyncpa [#allocation4], 1

</llo_original>
